<compile_context>
chip_gen: v7x
topology: tpu7x:2x2x1
jax: 0.10.0
libtpu: 0.0.40
codegen_flags: <defaults>
</compile_context>

<pallas_src>
import functools
import math

import jax
import jax.numpy as jnp
import numpy as np
from jax.experimental import pallas as pl
from jax.experimental.pallas import tpu as pltpu


def _vmem_budget() -> int:
    """Usable scoped-VMEM budget: physical capacity minus ~1/8 headroom."""
    try:
        cap = int(pltpu.get_tpu_info().vmem_capacity_bytes)
    except Exception:
        cap = 64 << 20          # conservative default = v7x per-TensorCore VMEM
    return max(cap * 7 // 8, 16 << 20)


# ---------------------------------------------------------------------------
# Fused single-pass kernel: per-batch slab resident in VMEM.
# ---------------------------------------------------------------------------
def _fused_kernel(w_ref, x_ref, o_ref, *, k_size: int, g: int, c: int):
    """Sum over N, conv + sigmoid over C, rescale -- one batch per grid step.

    w_ref: SMEM (k,) f32 conv taps, pre-scaled by 1/N (true N, pre-padding).
    x_ref: VMEM (1, Np, Cp) packed input slab (Cp = g*c).
    o_ref: VMEM (1, Np, Cp) output slab.
    """
    x = x_ref[...]                                     # (1, Np, Cp)
    n_rows = x.shape[1]

    if n_rows % 8 == 0:
        # MXU column-sum: no f32 copy of the slab, uses the otherwise-idle MXU.
        ones = jnp.ones((1, n_rows), dtype=x.dtype)
        sums = jnp.dot(ones, x[0], preferred_element_type=jnp.float32)  # (1, Cp)
    else:
        sums = jnp.sum(x.astype(jnp.float32), axis=1)                   # (1, Cp)

    # Fold the g packed row-groups back into true channel sums.
    y = sums[:, 0:c]
    for j in range(1, g):
        y = y + sums[:, j * c:(j + 1) * c]             # (1, c)

    # k-tap cross-correlation with zero padding (PyTorch Conv1d semantics);
    # the 1/N of the mean is already folded into the taps.
    pad = (k_size - 1) // 2
    if pad > 0:
        zp = jnp.zeros((1, pad), dtype=y.dtype)
        ypad = jnp.concatenate([zp, y, zp], axis=1)    # (1, c + 2*pad)
    else:
        ypad = y
    conv = jnp.zeros_like(y)
    for j in range(k_size):                            # static unroll, k tiny
        conv = conv + w_ref[j] * ypad[:, j:j + c]

    s = jax.nn.sigmoid(conv)                           # (1, c) f32
    if g > 1:
        s = jnp.concatenate([s] * g, axis=1)           # (1, Cp)
    s = s.astype(x.dtype)
    # TODO(synk): on v5e with bf16 inputs an f32 multiply + bf16 store is
    # preferable (no native bf16 VALU); kept in x.dtype for v6e/v7x.
    o_ref[...] = (x * s).astype(o_ref.dtype)


# ---------------------------------------------------------------------------
# Two-pass streaming fallback (slab too big for VMEM).
# ---------------------------------------------------------------------------
def _partial_sum_kernel(x_ref, sums_ref, acc_ref):
    """Accumulate packed channel sums over row tiles.

    x_ref:    VMEM (1, tn, Cp) input tile.
    sums_ref: VMEM (1, 1, Cp) f32 output: per-(batch, split) channel sums.
    acc_ref:  VMEM (1, Cp) f32 running accumulator.
    """
    n = pl.program_id(2)

    @pl.when(n == 0)
    def _init():
        acc_ref[...] = jnp.zeros_like(acc_ref)

    tn = x_ref.shape[1]
    ones = jnp.ones((1, tn), dtype=x_ref.dtype)
    # MXU ones-dot: f32 accumulation without materializing an f32 tile copy.
    acc_ref[...] += jnp.dot(ones, x_ref[0], preferred_element_type=jnp.float32)

    @pl.when(n == pl.num_programs(2) - 1)
    def _finalize():
        sums_ref[...] = acc_ref[...].reshape(sums_ref.shape)


def _scale_kernel(s_ref, x_ref, o_ref):
    """out = x * gate, streamed tile by tile (gate already in x.dtype)."""
    # TODO(synk): on v5e with bf16 inputs, compute the product in f32.
    o_ref[...] = (x_ref[...] * s_ref[...]).astype(o_ref.dtype)


def _pick_tile_rows(n_rows: int, row_bytes: int, *, target_bytes: int,
                    vmem_cap: int) -> int:
    """Largest row tile (multiple of 8, dividing n_rows) with block size <=
    ~target_bytes, keeping 4 double-buffered blocks well inside vmem_cap."""
    target = min(target_bytes, vmem_cap // 6)
    cap = max(8, target // max(row_bytes, 1))
    if n_rows <= cap:
        return n_rows                          # full extent: always legal
    t = (min(n_rows, cap) // 8) * 8
    while t >= 8:
        if n_rows % t == 0:
            return t
        t -= 8
    return n_rows


def echannel_attn(x: jax.Array, conv_w: jax.Array, k_size: int = 3) -> jax.Array:
    """x: (B, N, C); conv_w: taps of Conv1d(1, 1, k, bias=False)."""
    assert k_size % 2 == 1, "ECA uses an odd kernel size (PyTorch padding match)"
    B, N, C = x.shape
    itemsize = x.dtype.itemsize
    vmem_cap = _vmem_budget()

    # ---- lane packing: fold g rows of N into the channel axis so the lane
    # (last) dim is a multiple of 128 -> unmasked vector stores. --------------
    if C % 128 == 0:
        g = 1
    else:
        cand = 128 // math.gcd(C, 128)
        g = cand if N >= cand else 1           # tiny-N fallback: masked stores
    n_pad = (-N) % g                           # zero rows: sums use true N

    Np = (N + n_pad) // g
    Cp = g * C
    slab_bytes = Np * Cp * itemsize

    # ---- fused vs two-pass decision ------------------------------------------
    f32_tmp = 0 if Np % 8 == 0 else 4 * Np * Cp        # jnp.sum upcast temp
    fused_need = 4 * slab_bytes + f32_tmp + (2 << 20)  # 2x in + 2x out slabs
    fused = fused_need <= vmem_cap

    if not fused:
        # Make Np a multiple of 8 so row tiling always finds an (8,128)-legal
        # divisor; the extra zero rows are sliced off at the end.
        extra = ((-Np) % 8) * g
        n_pad += extra
        Np = (N + n_pad) // g
        slab_bytes = Np * Cp * itemsize

    x_in = x if n_pad == 0 else jnp.pad(x, ((0, 0), (0, n_pad), (0, 0)))
    xp = x_in.reshape(B, Np, Cp)

    # Fold the 1/N of the mean into the conv taps (kernels only sum).
    w = jnp.asarray(conv_w, dtype=jnp.float32).reshape(-1) / float(N)

    if fused:
        out_p = pl.pallas_call(
            functools.partial(_fused_kernel, k_size=k_size, g=g, c=C),
            out_shape=jax.ShapeDtypeStruct((B, Np, Cp), x.dtype),
            grid_spec=pltpu.PrefetchScalarGridSpec(
                num_scalar_prefetch=0,
                grid=(B,),
                in_specs=[
                    pl.BlockSpec(memory_space=pltpu.SMEM),            # taps
                    pl.BlockSpec((1, Np, Cp), lambda b: (b, 0, 0)),   # slab
                ],
                out_specs=pl.BlockSpec((1, Np, Cp), lambda b: (b, 0, 0)),
            ),
            compiler_params=pltpu.CompilerParams(
                dimension_semantics=("parallel",),
                vmem_limit_bytes=vmem_cap,
            ),
        )(w, xp)
    else:
        # ---- pass 1: per-batch channel sums (streamed ~4 MiB tiles) ----------
        tn = _pick_tile_rows(Np, Cp * itemsize, target_bytes=4 << 20,
                             vmem_cap=vmem_cap)
        nt = Np // tn
        # Second parallel axis so both v7x TensorCores have pass-1 work even
        # when B is small.
        P = 2 if (B < 4 and nt % 2 == 0 and nt >= 2) else 1
        nt_inner = nt // P
        block_bytes = tn * Cp * itemsize
        vmem_limit = int(min(max(4 * block_bytes + (4 << 20), 16 << 20),
                             vmem_cap))

        partial = pl.pallas_call(
            _partial_sum_kernel,
            out_shape=jax.ShapeDtypeStruct((B, P, Cp), jnp.float32),
            grid_spec=pltpu.PrefetchScalarGridSpec(
                num_scalar_prefetch=0,
                grid=(B, P, nt_inner),
                in_specs=[pl.BlockSpec(
                    (1, tn, Cp), lambda b, p, n: (b, p * nt_inner + n, 0))],
                out_specs=pl.BlockSpec((1, 1, Cp), lambda b, p, n: (b, p, 0)),
                scratch_shapes=[pltpu.VMEM((1, Cp), jnp.float32)],
            ),
            compiler_params=pltpu.CompilerParams(
                dimension_semantics=("parallel", "parallel", "arbitrary"),
                vmem_limit_bytes=vmem_limit,
            ),
        )(xp)

        # ---- tiny (B, C) conv + sigmoid in plain JAX --------------------------
        y = partial.sum(axis=1).reshape(B, g, C).sum(axis=1)        # (B, C)
        pad = (k_size - 1) // 2
        ypad = jnp.pad(y, ((0, 0), (pad, pad)))
        conv = sum(w[j] * ypad[:, j:j + C] for j in range(k_size))
        s = jax.nn.sigmoid(conv)                                     # (B, C) f32
        gate = jnp.tile(s, (1, g)).reshape(B, 1, Cp).astype(x.dtype)

        # ---- pass 2: stream x tiles and rescale -------------------------------
        # Note: pass input_output_aliases={1: 0} here if the caller can donate x.
        out_p = pl.pallas_call(
            _scale_kernel,
            out_shape=jax.ShapeDtypeStruct((B, Np, Cp), x.dtype),
            grid_spec=pl.GridSpec(
                grid=(B, nt),
                in_specs=[
                    pl.BlockSpec((1, 1, Cp), lambda b, n: (b, 0, 0)),   # gate
                    pl.BlockSpec((1, tn, Cp), lambda b, n: (b, n, 0)),  # x tile
                ],
                out_specs=pl.BlockSpec((1, tn, Cp), lambda b, n: (b, n, 0)),
            ),
            compiler_params=pltpu.CompilerParams(
                dimension_semantics=("parallel", "parallel"),
                vmem_limit_bytes=vmem_limit,
            ),
        )(gate, xp)

    out = out_p.reshape(B, Np * g, C)
    if n_pad:
        out = out[:, :N, :]
    return out


def _reference(x, conv_w, k_size=3):
    pad = (k_size - 1) // 2
    B, N, C = x.shape
    w = jnp.asarray(conv_w, jnp.float32).reshape(-1)
    y = x.astype(jnp.float32).mean(axis=1)                    # (B, C)
    ypad = jnp.pad(y, ((0, 0), (pad, pad)))
    conv = sum(w[j] * ypad[:, j:j + C] for j in range(k_size))
    s = jax.nn.sigmoid(conv)                                   # (B, C)
    return (x.astype(jnp.float32) * s[:, None, :]).astype(x.dtype)


if __name__ == "__main__":
    B, N, C = 2, 16, 32
    k_size = 3

    key = jax.random.PRNGKey(0)
    kx, kw = jax.random.split(key)
    x = jax.random.normal(kx, (B, N, C), dtype=jnp.float32)
    # Conv1d(1, 1, k, bias=False) weight has shape (1, 1, k); keep the (k,) taps.
    conv_w = jax.random.normal(kw, (k_size,), dtype=jnp.float32) * 0.5

    out = echannel_attn(x, conv_w, k_size=k_size)
    out = jax.block_until_ready(out)

    ref = _reference(x, conv_w, k_size=k_size)
    np.testing.assert_allclose(np.asarray(out), np.asarray(ref), rtol=1e-5, atol=1e-5)
    print("KERNEL_OK")
</pallas_src>

<mosaic_0001>
module attributes {stable_mosaic.version = 11 : i64} {
  func.func @_fused_kernel(%arg0: i32, %arg1: memref<3xf32, #tpu.memory_space<smem>>, %arg2: memref<1x4x128xf32, #tpu.memory_space<vmem>>, %arg3: memref<1x4x128xf32, #tpu.memory_space<vmem>>) attributes {dimension_semantics = [#tpu.dimension_semantics<parallel>], iteration_bounds = array<i64: 2>, scalar_prefetch = 0 : i64, scratch_operands = 0 : i64, tpu.core_type = #tpu.core_type<tc>, window_params = [{transform_indices = @transform_0, window_bounds = array<i64: 3>}, {transform_indices = @transform_1, window_bounds = array<i64: 1, 4, 128>}, {transform_indices = @transform_2, window_bounds = array<i64: 1, 4, 128>}]} {
    %c0 = arith.constant 0 : index
    %c0_0 = arith.constant 0 : index
    %c0_1 = arith.constant 0 : index
    %0 = vector.load %arg2[%c0, %c0_0, %c0_1] : memref<1x4x128xf32, #tpu.memory_space<vmem>>, vector<1x4x128xf32>
    %cst = arith.constant dense<0.000000e+00> : vector<1x128xf32>
    %1 = vector.multi_reduction <add>, %0, %cst [1] : vector<1x4x128xf32> to vector<1x128xf32>
    %2 = vector.extract_strided_slice %1 {offsets = [0, 0], sizes = [1, 32], strides = [1, 1]} : vector<1x128xf32> to vector<1x32xf32>
    %3 = vector.extract_strided_slice %1 {offsets = [0, 32], sizes = [1, 32], strides = [1, 1]} : vector<1x128xf32> to vector<1x32xf32>
    %4 = arith.addf %2, %3 : vector<1x32xf32>
    %5 = vector.extract_strided_slice %1 {offsets = [0, 64], sizes = [1, 32], strides = [1, 1]} : vector<1x128xf32> to vector<1x32xf32>
    %6 = arith.addf %4, %5 : vector<1x32xf32>
    %7 = vector.extract_strided_slice %1 {offsets = [0, 96], sizes = [1, 32], strides = [1, 1]} : vector<1x128xf32> to vector<1x32xf32>
    %8 = arith.addf %6, %7 : vector<1x32xf32>
    %cst_2 = arith.constant 0.000000e+00 : f32
    %9 = vector.broadcast %cst_2 : f32 to vector<1x1xf32>
    %10 = tpu.concatenate %9, %8, %9 in 1 : vector<1x1xf32>, vector<1x32xf32>, vector<1x1xf32> -> vector<1x34xf32>
    %cst_3 = arith.constant 0.000000e+00 : f32
    %11 = vector.broadcast %cst_3 : f32 to vector<1x32xf32>
    %c0_4 = arith.constant 0 : index
    %12 = memref.load %arg1[%c0_4] : memref<3xf32, #tpu.memory_space<smem>>
    %13 = vector.extract_strided_slice %10 {offsets = [0, 0], sizes = [1, 32], strides = [1, 1]} : vector<1x34xf32> to vector<1x32xf32>
    %14 = vector.broadcast %12 : f32 to vector<1x32xf32>
    %15 = arith.mulf %14, %13 : vector<1x32xf32>
    %16 = arith.addf %11, %15 : vector<1x32xf32>
    %c1 = arith.constant 1 : index
    %17 = memref.load %arg1[%c1] : memref<3xf32, #tpu.memory_space<smem>>
    %18 = vector.extract_strided_slice %10 {offsets = [0, 1], sizes = [1, 32], strides = [1, 1]} : vector<1x34xf32> to vector<1x32xf32>
    %19 = vector.broadcast %17 : f32 to vector<1x32xf32>
    %20 = arith.mulf %19, %18 : vector<1x32xf32>
    %21 = arith.addf %16, %20 : vector<1x32xf32>
    %c2 = arith.constant 2 : index
    %22 = memref.load %arg1[%c2] : memref<3xf32, #tpu.memory_space<smem>>
    %23 = vector.extract_strided_slice %10 {offsets = [0, 2], sizes = [1, 32], strides = [1, 1]} : vector<1x34xf32> to vector<1x32xf32>
    %24 = vector.broadcast %22 : f32 to vector<1x32xf32>
    %25 = arith.mulf %24, %23 : vector<1x32xf32>
    %26 = arith.addf %21, %25 : vector<1x32xf32>
    %27 = arith.negf %26 : vector<1x32xf32>
    %28 = math.exp %27 : vector<1x32xf32>
    %cst_5 = arith.constant 1.000000e+00 : f32
    %29 = vector.broadcast %cst_5 : f32 to vector<1x32xf32>
    %30 = arith.addf %29, %28 : vector<1x32xf32>
    %31 = arith.divf %29, %30 : vector<1x32xf32>
    %32 = tpu.concatenate %31, %31, %31, %31 in 1 : vector<1x32xf32>, vector<1x32xf32>, vector<1x32xf32>, vector<1x32xf32> -> vector<1x128xf32>
    %33 = vector.shape_cast %32 : vector<1x128xf32> to vector<1x1x128xf32>
    %34 = vector.broadcast %33 : vector<1x1x128xf32> to vector<1x4x128xf32>
    %35 = arith.mulf %0, %34 : vector<1x4x128xf32>
    %c0_6 = arith.constant 0 : index
    %c0_7 = arith.constant 0 : index
    %c0_8 = arith.constant 0 : index
    %36 = vector.load %arg3[%c0_6, %c0_7, %c0_8] : memref<1x4x128xf32, #tpu.memory_space<vmem>>, vector<1x4x128xf32>
    tpu.vector_store %arg3[%c0_6, %c0_7, %c0_8], %35 {strides = array<i32>} : memref<1x4x128xf32, #tpu.memory_space<vmem>>, vector<1x4x128xf32>,
    return
  }
  func.func @transform_0(%arg0: i32) -> i32 {
    %c0_i32 = arith.constant 0 : i32
    %c0_i32_0 = arith.constant 0 : i32
    return %c0_i32 : i32
  }
  func.func @transform_1(%arg0: i32) -> (i32, i32, i32) {
    %c0_i32 = arith.constant 0 : i32
    %c0_i32_0 = arith.constant 0 : i32
    %c0_i32_1 = arith.constant 0 : i32
    return %arg0, %c0_i32, %c0_i32_0 : i32, i32, i32
  }
  func.func @transform_2(%arg0: i32) -> (i32, i32, i32) {
    %c0_i32 = arith.constant 0 : i32
    %c0_i32_0 = arith.constant 0 : i32
    %c0_i32_1 = arith.constant 0 : i32
    return %arg0, %c0_i32, %c0_i32_0 : i32, i32, i32
  }
}

</mosaic_0001>

<llo_original>
// kernel: tpu_custom_call.1
$region0: #{tpu_custom_call.1}
  #allocation0 [shape = 'u32[]', space=smem, size = 0x4, offset = 0x4, fixed_abs, tag = 'smem constant byte address 0x4 - core index']
  #allocation1 [shape = 'u32[144,128]{1,0:T(1,128)}', space=vmem, size = 0x12000, scoped, tag = 'internal scratch']
  %s0 = inlined_call_operand.hbm [shape: f32[3], index: 0, kind: input, shape index: {}]
  %s1 = inlined_call_operand.hbm [shape: f32[2,4,128], index: 1, kind: input, shape index: {}]
  %s2 = inlined_call_operand.hbm [shape: f32[2,4,128], index: 2, kind: output, shape index: {}]
  %s3 = sld [smem:[#allocation0]]
  $region49: #{tpu_custom_call.1} parent=0
    _
  %s5 = ssub.s32 1, %s3
  %s6 = scalar_select 0, %s5, %s3
  $region1: #{tpu_custom_call.1} parent=0
    #allocation2 [shape = 'u8[512]{0}', space=smem, size = 0x200, scoped, tag = 'input window, operand 0, single buffered']
    #allocation3 [shape = 's32[2]{0}', space=sflag, size = 0x8, scoped, tag = 'scoped memory for tpu_custom_call.1']
    #allocation4 [shape = 's32[2]{0}', space=sflag, size = 0x8, scoped, tag = 'scoped memory for tpu_custom_call.1']
    #allocation5 [shape = 's32[2]{0}', space=sflag, size = 0x8, scoped, tag = 'scoped memory for tpu_custom_call.1']
    #allocation6 [shape = 'u8[4096]{0}', space=vmem, size = 0x1000, scoped, tag = 'input window, operand 1']
    #allocation7 [shape = 'u8[4096]{0}', space=vmem, size = 0x1000, scoped, tag = 'output window, operand 0']
    %7 = vsyncpa [#allocation5], 0
    %8 = vsyncpa [#allocation3], 0
    %s9 = scalar_lea.sflag [#allocation3], 1
    %10 = vsyncpa %s9, 0
    %11 = vsyncpa [#allocation4], 0
    %s12 = scalar_lea.sflag [#allocation4], 1
    %13 = vsyncpa %s12, 0
    loop: start=0, step=1, limit=4
    $region2: #{tpu_custom_call.1} parent=1 // loop_pre_header
      _
    $region3: #{tpu_custom_call.1} parent=1 // loop_header
      %s15 = sphi 0, %s19
      %p16 = scmp.ge.s32.totalorder %s15, 4
      %s23 = sphi 0, %s23
      %s25 = sphi 0, %s23
      %s26 = sphi 0, %s25
      %s40 = sphi 0, %s26
      %s46 = sphi 0, %s48
      %s49 = sphi 0, %s46
      %s50 = sphi 0, %s49
      %s66 = sphi 0, %s50
      %s72 = sphi 0, %s74
      %s75 = sphi 0, %s72
      %s76 = sphi 0, %s75
      %s92 = sphi 0, %s76
    $region4: #{tpu_custom_call.1} parent=1 // loop_header_branch
      %18 = sbr.rel (%p16) target = $region8
    $region5: #{tpu_custom_call.1} parent=1 // loop_body
      %s20 = ssub.s32 %s15, 1
      %s21 = ssub.s32 %s15, 2
      %s22 = sadd.s32 %s15, 1
      %s24 = sadd.s32 %s23, 1
      %p27 = scmp.eq.s32.totalorder %s15, 1
      %p28 = scmp.ne.s32.totalorder %s23, %s25
      %p29 = scmp.eq.s32.totalorder %s15, 0
      %p30 = por %p28, %p29
      %p31 = scmp.ne.s32.totalorder %s23, %s25
      %p32 = scmp.eq.s32.totalorder %s20, 1
      %p33 = por %p31, %p32
      %p34 = scmp.ne.s32.totalorder %s25, %s26
      %p35 = scmp.eq.s32.totalorder %s20, 0
      %p36 = por %p34, %p35
      %p37 = scmp.ne.s32.totalorder %s25, %s26
      %p38 = scmp.eq.s32.totalorder %s21, 1
      %p39 = por %p37, %p38
      %p41 = scmp.ne.s32.totalorder %s26, %s40
      %p42 = scmp.eq.s32.totalorder %s21, 0
      %p43 = por %p41, %p42
      %s44 = ssub.s32 %s15, %s22
      %p45 = scmp.eq.s32.totalorder %s44, 0
      %s47 = sadd.s32 %s46, 1
      %s48 = scalar_select %p45, %s46, %s47
      %p51 = pneg %p45
      %p52 = scmp.eq.s32.totalorder %s15, 1
      %p53 = por %p51, %p52
      %p54 = scmp.ne.s32.totalorder %s46, %s49
      %p55 = scmp.eq.s32.totalorder %s15, 0
      %p56 = por %p54, %p55
      %p57 = scmp.ne.s32.totalorder %s46, %s49
      %p58 = scmp.eq.s32.totalorder %s20, 1
      %p59 = por %p57, %p58
      %p60 = scmp.ne.s32.totalorder %s49, %s50
      %p61 = scmp.eq.s32.totalorder %s20, 0
      %p62 = por %p60, %p61
      %p63 = scmp.ne.s32.totalorder %s49, %s50
      %p64 = scmp.eq.s32.totalorder %s21, 1
      %p65 = por %p63, %p64
      %p67 = scmp.ne.s32.totalorder %s50, %s66
      %p68 = scmp.eq.s32.totalorder %s21, 0
      %p69 = por %p67, %p68
      %s70 = ssub.s32 %s15, %s22
      %p71 = scmp.eq.s32.totalorder %s70, 0
      %s73 = sadd.s32 %s72, 1
      %s74 = scalar_select %p71, %s72, %s73
      %p77 = pneg %p71
      %p78 = scmp.eq.s32.totalorder %s15, 1
      %p79 = por %p77, %p78
      %p80 = scmp.ne.s32.totalorder %s72, %s75
      %p81 = scmp.eq.s32.totalorder %s15, 0
      %p82 = por %p80, %p81
      %p83 = scmp.ne.s32.totalorder %s72, %s75
      %p84 = scmp.eq.s32.totalorder %s20, 1
      %p85 = por %p83, %p84
      %p86 = scmp.ne.s32.totalorder %s75, %s76
      %p87 = scmp.eq.s32.totalorder %s20, 0
      %p88 = por %p86, %p87
      %p89 = scmp.ne.s32.totalorder %s75, %s76
      %p90 = scmp.eq.s32.totalorder %s21, 1
      %p91 = por %p89, %p90
      %p93 = scmp.ne.s32.totalorder %s76, %s92
      %p94 = scmp.eq.s32.totalorder %s21, 0
      %p95 = por %p93, %p94
      %p96 = scmp.le.s32.totalorder 1, %s15
      %p97 = scmp.lt.s32.totalorder %s15, 3
      %p98 = pnand %p96, %p97
      %p99 = pneg %p98
      // Predicated region
      $region9: #{tpu_custom_call.1} parent=5 // pred_check
        _
      $region10: #{tpu_custom_call.1} parent=5 // pred_check_branch
        %101 = sbr.rel (%p98) target = $region12
      $region11: #{tpu_custom_call.1} parent=5 // pred_region
        %s102 = ssub.s32 %s15, 1
        // Predicated region
        $region13: #{tpu_custom_call.1} parent=11 // pred_check
          %p103 = pneg %p36
        $region14: #{tpu_custom_call.1} parent=11 // pred_check_branch
          %105 = sbr.rel (%p103) target = $region16
        $region15: #{tpu_custom_call.1} parent=11 // pred_region
          %s107 = ssub.s32 16, 16
          %108 = vsyncadd [#allocation5], %s107
          %111 = dma.hbm_to_smem %s0, 16, [#allocation2], [#allocation5]
        $region16: #{tpu_custom_call.1} parent=11 // pred_fallthru
          _
      $region12: #{tpu_custom_call.1} parent=5 // pred_fallthru
        _
      %p112 = scmp.lt.s32.totalorder %s15, 2
      // Predicated region
      $region17: #{tpu_custom_call.1} parent=5 // pred_check
        %p113 = pneg %p112
      $region18: #{tpu_custom_call.1} parent=5 // pred_check_branch
        %115 = sbr.rel (%p113) target = $region20
      $region19: #{tpu_custom_call.1} parent=5 // pred_region
        // Predicated region
        $region21: #{tpu_custom_call.1} parent=19 // pred_check
          %p116 = pneg %p56
        $region22: #{tpu_custom_call.1} parent=19 // pred_check_branch
          %118 = sbr.rel (%p116) target = $region24
        $region23: #{tpu_custom_call.1} parent=19 // pred_region
          %s119 = sand.u32 %s46, 1
          %s120 = scalar_lea.sflag [#allocation3], %s119
          %s121 = sand.u32 %s46, 1
          %s122 = smul.addr %s121, 4
          %s123 = scalar_lea.vmem [#allocation6], %s122
          %s125 = ssub.s32 64, 64
          %126 = vsyncadd %s120, %s125
          %s127 = smul.addr %s15, 64
          %s128 = scalar_lea.hbm %s1, %s127
          %s130 = sshll.u32 %s123, 4
          %s131 = int_to_ptr.vmem [resolvable:$true] %s130
          %133 = dma.hbm_to_vmem [thread:$0]  %s128, 64, %s131, %s120
        $region24: #{tpu_custom_call.1} parent=19 // pred_fallthru
          _
      $region20: #{tpu_custom_call.1} parent=5 // pred_fallthru
        _
      %p134 = scmp.le.s32.totalorder 1, %s15
      %p135 = scmp.lt.s32.totalorder %s15, 3
      %p136 = pnand %p134, %p135
      %p137 = pneg %p136
      // Predicated region
      $region25: #{tpu_custom_call.1} parent=5 // pred_check
        _
      $region26: #{tpu_custom_call.1} parent=5 // pred_check_branch
        %139 = sbr.rel (%p136) target = $region28
      $region27: #{tpu_custom_call.1} parent=5 // pred_region
        %s140 = ssub.s32 %s15, 1
        // Predicated region
        $region29: #{tpu_custom_call.1} parent=27 // pred_check
          %p141 = pneg %p36
        $region30: #{tpu_custom_call.1} parent=27 // pred_check_branch
          %143 = sbr.rel (%p141) target = $region32
        $region31: #{tpu_custom_call.1} parent=27 // pred_region
          %144 = dma.done [#allocation5], 16
        $region32: #{tpu_custom_call.1} parent=27 // pred_fallthru
          _
        %s145 = sand.u32 %s49, 1
        %s146 = scalar_lea.sflag [#allocation3], %s145
        %s147 = sand.u32 %s49, 1
        %s148 = smul.addr %s147, 4
        %s149 = scalar_lea.vmem [#allocation6], %s148
        // Predicated region
        $region33: #{tpu_custom_call.1} parent=27 // pred_check
          %p150 = pneg %p62
        $region34: #{tpu_custom_call.1} parent=27 // pred_check_branch
          %152 = sbr.rel (%p150) target = $region36
        $region35: #{tpu_custom_call.1} parent=27 // pred_region
          %153 = dma.done %s146, 64
        $region36: #{tpu_custom_call.1} parent=27 // pred_fallthru
          _
        %154 = sfence
        %p155 = pneg %p36
        %p156 = pneg %p33
        %s157 = sand.u32 %s49, 1
        %s158 = scalar_lea.sflag [#allocation3], %s157
        %s159 = sand.u32 %s49, 1
        %s160 = smul.addr %s159, 4
        %s161 = scalar_lea.vmem [#allocation6], %s160
        %p162 = pneg %p62
        %p163 = pneg %p59
        %p164 = pneg %p88
        %p165 = pneg %p85
        %s166 = sand.u32 %s75, 1
        %s167 = scalar_lea.sflag [#allocation4], %s166
        %s168 = sand.u32 %s75, 1
        %s169 = smul.addr %s168, 4
        %s170 = scalar_lea.vmem [#allocation7], %s169
        %v171 = vld [vmem:[%s149] sm:$0xf]
        %vm172 = vcmask 1043456
        %v173 = vsel %vm172, %v171, 0.0
        %v174 = vrot.slane %v173, 4
        %v175 = vadd.f32 %v173, %v174
        %v176 = vrot.slane %v175, 2
        %v177 = vadd.f32 %v175, %v176
        %v178 = vrot.slane %v177, 1
        %v179 = vadd.f32 %v177, %v178
        %181 = vrot.lane.b32.xlu0 %v179, 96
        %v182 = vpop.permute.xlu0 %181
        %v184 = vadd.f32 %v179, %v182
        %185 = vrot.lane.b32.xlu0 %v179, 64
        %v186 = vpop.permute.xlu0 %185
        %v188 = vadd.f32 %v184, %v186
        %189 = vrot.lane.b32.xlu0 %v179, 32
        %v190 = vpop.permute.xlu0 %189
        %v192 = vadd.f32 %v188, %v190
        %194 = vrot.lane.b32.xlu0 %v192, 1
        %v195 = vpop.permute.xlu0 %194
        %vm197 = vcmask 7168
        %v198 = vsel %vm197, 0.0, %v195
        %vm199 = vcmask 269312
        %v200 = vsel %vm199, %v198, 0.0
        %s201 = sld [smem:[#allocation2]]
        %v202 = vstv %s201
        %v203 = vmul.f32 %v202, %v200
        %v204 = vadd.f32 %v203, 0.0
        %s205 = sld [smem:[#allocation2 + $0x1]]
        %v206 = vstv %s205
        %v207 = vmul.f32 %v206, %v200
        %209 = vrot.lane.b32.xlu0 %v207, 127
        %v210 = vpop.permute.xlu0 %209
        %v212 = vadd.f32 %v204, %v210
        %s213 = sld [smem:[#allocation2 + $0x2]]
        %v214 = vstv %s213
        %v215 = vmul.f32 %v214, %v200
        %217 = vrot.lane.b32.xlu0 %v215, 126
        %v218 = vpop.permute.xlu0 %217
        %v220 = vadd.f32 %v212, %v218
        %v221 = vxor.u32 %v220, 2147483648
        %v222 = vmul.f32 %v221, 1.442695
        %v223 = vpow.pop %v222
        %v224 = vadd.f32 %v223, 1.0
        %v225 = vrcp.pop %v224
        %v226 = vmul.f32 1.0, %v225
        %228 = vrot.lane.b32.xlu0 %v226, 32
        %v229 = vpop.permute.xlu0 %228
        %231 = vrot.lane.b32.xlu0 %v226, 64
        %v232 = vpop.permute.xlu0 %231
        %234 = vrot.lane.b32.xlu0 %v226, 96
        %v235 = vpop.permute.xlu0 %234
        %vm237 = vcmask 261120
        %v238 = vsel %vm237, %v226, %v229
        %vm239 = vcmask 523264
        %v240 = vsel %vm239, %v238, %v232
        %vm241 = vcmask 785408
        %v242 = vsel %vm241, %v240, %v235
        %v243 = vlaneseq
        %v244 = vshrl.u32 %v243, 7
        %v245 = vsub.s32 0, %v244
        %v246 = vrot.slane %v242, %v245
        %v247 = vmul.f32 %v171, %v246
        %248 = vst [vmem:[%s170] sm:$0xf] %v247
        %s249 = sand.u32 %s75, 1
        %s250 = scalar_lea.sflag [#allocation4], %s249
        %s251 = sand.u32 %s75, 1
        %s252 = smul.addr %s251, 4
        %s253 = scalar_lea.vmem [#allocation7], %s252
        // Predicated region
        $region37: #{tpu_custom_call.1} parent=27 // pred_check
          %p254 = pneg %p85
        $region38: #{tpu_custom_call.1} parent=27 // pred_check_branch
          %256 = sbr.rel (%p254) target = $region40
        $region39: #{tpu_custom_call.1} parent=27 // pred_region
          %s258 = ssub.s32 64, 64
          %259 = vsyncadd %s250, %s258
          %s260 = smul.addr %s20, 64
          %s261 = scalar_lea.hbm %s2, %s260
          %s263 = sshll.u32 %s253, 4
          %s264 = int_to_ptr.vmem [resolvable:$true] %s263
          %266 = dma.vmem_to_hbm [thread:$0]  %s264, 64, %s261, %s250
        $region40: #{tpu_custom_call.1} parent=27 // pred_fallthru
          _
      $region28: #{tpu_custom_call.1} parent=5 // pred_fallthru
        _
      %p267 = scmp.le.s32.totalorder 2, %s15
      // Predicated region
      $region41: #{tpu_custom_call.1} parent=5 // pred_check
        %p268 = pneg %p267
      $region42: #{tpu_custom_call.1} parent=5 // pred_check_branch
        %270 = sbr.rel (%p268) target = $region44
      $region43: #{tpu_custom_call.1} parent=5 // pred_region
        %s271 = ssub.s32 %s15, 2
        // Predicated region
        $region45: #{tpu_custom_call.1} parent=43 // pred_check
          %p272 = pneg %p91
        $region46: #{tpu_custom_call.1} parent=43 // pred_check_branch
          %274 = sbr.rel (%p272) target = $region48
        $region47: #{tpu_custom_call.1} parent=43 // pred_region
          %s275 = sand.u32 %s76, 1
          %s276 = scalar_lea.sflag [#allocation4], %s275
          %s277 = sand.u32 %s76, 1
          %s278 = smul.addr %s277, 4
          %s279 = scalar_lea.vmem [#allocation7], %s278
          %280 = dma.done %s276, 64
        $region48: #{tpu_custom_call.1} parent=43 // pred_fallthru
          _
      $region44: #{tpu_custom_call.1} parent=5 // pred_fallthru
        _
    $region6: #{tpu_custom_call.1} parent=1 // loop_footer
      %s19 = sadd.s32 1, %s15
    $region7: #{tpu_custom_call.1} parent=1 // loop_footer_branch
      %14 = sbr.rel target = $region3
    $region8: #{tpu_custom_call.1} parent=1 // loop_exit
      _
    %281 = vsyncpa [#allocation3], 1
    %s282 = scalar_lea.sflag [#allocation3], 1
    %283 = vsyncpa %s282, 1
    %284 = vsyncpa [#allocation4], 1
    %s285 = scalar_lea.sflag [#allocation4], 1
    %286 = vsyncpa %s285, 1
    %287 = vsyncpa [#allocation5], 1
    %s288 = scalar_lea.sflag [#allocation5], 1
    %289 = vsyncpa %s288, 1

</llo_original>
